<compile_context>
chip_gen: v7x
topology: tpu7x:2x2x1
jax: 0.10.0
libtpu: 0.0.40
codegen_flags: <defaults>
</compile_context>

<pallas_src>
import jax
import jax.numpy as jnp
from jax.experimental import pallas as pl
from jax.experimental.pallas import tpu as pltpu


_NUM_DMA_CHUNKS = 4  # 2-4 in-flight DMAs is enough to saturate HBM for a copy.


def _chunk_bounds(B: int, n: int):
    """Split [0, B) into up to n contiguous, non-empty (start, end) ranges."""
    n = max(1, min(n, B))
    base, rem = divmod(B, n)
    bounds, start = [], 0
    for i in range(n):
        size = base + (1 if i < rem else 0)
        bounds.append((start, start + size))
        start += size
    return bounds


def _make_dma_copy_kernel(chunk_bounds):
    """HBM->HBM copy: start all chunk DMAs, then wait on all of them."""

    def kernel(c_hbm, o_hbm, sems):
        copies = []
        for idx, (s, e) in enumerate(chunk_bounds):
            cp = pltpu.make_async_copy(c_hbm.at[s:e], o_hbm.at[s:e], sems.at[idx])
            cp.start()
            copies.append(cp)
        for cp in copies:
            cp.wait()

    return kernel


def identity_embedding(c: jax.Array, *, use_kernel: bool = True) -> jax.Array:
    """Pallas equivalent of IdentityEmbedding.forward: (B, F) -> (B, 1, F).

    use_kernel=False is the preferred production path: the op is a pure identity,
    so it should be a zero-cost reshape (or fused into the producer/consumer).
    use_kernel=True keeps an explicit kernel boundary, implemented as a direct
    HBM->HBM DMA (no VMEM round trip).
    """
    B, F = c.shape

    if not use_kernel:
        # Free, metadata-only unsqueeze — the 100% win recommended by the review.
        return c[:, None, :]

    itemsize = jnp.dtype(c.dtype).itemsize
    bounds = _chunk_bounds(B, _NUM_DMA_CHUNKS)

    out2d = pl.pallas_call(
        _make_dma_copy_kernel(bounds),
        out_shape=jax.ShapeDtypeStruct((B, F), c.dtype),
        in_specs=[pl.BlockSpec(memory_space=pl.ANY)],
        out_specs=pl.BlockSpec(memory_space=pl.ANY),
        scratch_shapes=[pltpu.SemaphoreType.DMA((len(bounds),))],
        cost_estimate=pl.CostEstimate(
            flops=0, transcendentals=0, bytes_accessed=2 * B * F * itemsize
        ),
    )(c)

    # Free metadata-only unsqueeze: (B, F) -> (B, 1, F), matching rearrange('b f -> b 1 f').
    return out2d[:, None, :]


if __name__ == "__main__":
    key = jax.random.PRNGKey(0)

    # Small shape consistent with the module's (batch, feature) input.
    B, F = 2, 32
    c = jax.random.normal(key, (B, F), dtype=jnp.float32)

    out = identity_embedding(c)            # kernel (HBM->HBM DMA) path
    out = jax.block_until_ready(out)

    ref = c[:, None, :]
    assert out.shape == (B, 1, F), out.shape
    assert out.dtype == c.dtype
    assert jnp.array_equal(out, ref)

    # Larger / aligned shape exercising the 4-chunk DMA path and bf16.
    B2, F2 = 16, 128
    c2 = jax.random.normal(jax.random.PRNGKey(1), (B2, F2), dtype=jnp.bfloat16)
    out2 = jax.block_until_ready(identity_embedding(c2))
    assert out2.shape == (B2, 1, F2)
    assert jnp.array_equal(out2, c2[:, None, :])

    # Zero-cost (no-kernel) path, which is what real code should use.
    out3 = jax.block_until_ready(identity_embedding(c, use_kernel=False))
    assert jnp.array_equal(out3, ref)

    print("KERNEL_OK")
</pallas_src>

<mosaic_0001>
module attributes {stable_mosaic.version = 11 : i64} {
  func.func @kernel(%arg0: memref<2x32xf32, #tpu.memory_space<any>>, %arg1: memref<2x32xf32, #tpu.memory_space<any>>, %arg2: memref<2x!tpu.dma_semaphore, #tpu.memory_space<semaphore_mem>>) attributes {dimension_semantics = [], scalar_prefetch = 0 : i64, scratch_operands = 1 : i64, tpu.core_type = #tpu.core_type<tc>} {
    %c0_i32 = arith.constant 0 : i32
    %c0_i32_0 = arith.constant 0 : i32
    %c0_i32_1 = arith.constant 0 : i32
    %0 = tpu.memref_slice %arg0[%c0_i32_0, %c0_i32_1] : memref<2x32xf32, #tpu.memory_space<any>> -> memref<1x32xf32, #tpu.memory_space<any>>
    %c0_i32_2 = arith.constant 0 : i32
    %c0_i32_3 = arith.constant 0 : i32
    %1 = tpu.memref_slice %arg1[%c0_i32_2, %c0_i32_3] : memref<2x32xf32, #tpu.memory_space<any>> -> memref<1x32xf32, #tpu.memory_space<any>>
    %2 = tpu.memref_slice %arg2[%c0_i32] : memref<2x!tpu.dma_semaphore, #tpu.memory_space<semaphore_mem>> -> memref<1x!tpu.dma_semaphore, #tpu.memory_space<semaphore_mem>>
    %3 = tpu.memref_squeeze %2 : memref<1x!tpu.dma_semaphore, #tpu.memory_space<semaphore_mem>> -> memref<!tpu.dma_semaphore, #tpu.memory_space<semaphore_mem>>
    tpu.enqueue_dma source(%0 : memref<1x32xf32, #tpu.memory_space<any>>) target(%1 : memref<1x32xf32, #tpu.memory_space<any>>) target_semaphore(%3 : memref<!tpu.dma_semaphore, #tpu.memory_space<semaphore_mem>>)
    %c1_i32 = arith.constant 1 : i32
    %c1_i32_4 = arith.constant 1 : i32
    %c0_i32_5 = arith.constant 0 : i32
    %4 = tpu.memref_slice %arg0[%c1_i32_4, %c0_i32_5] : memref<2x32xf32, #tpu.memory_space<any>> -> memref<1x32xf32, #tpu.memory_space<any>>
    %c1_i32_6 = arith.constant 1 : i32
    %c0_i32_7 = arith.constant 0 : i32
    %5 = tpu.memref_slice %arg1[%c1_i32_6, %c0_i32_7] : memref<2x32xf32, #tpu.memory_space<any>> -> memref<1x32xf32, #tpu.memory_space<any>>
    %6 = tpu.memref_slice %arg2[%c1_i32] : memref<2x!tpu.dma_semaphore, #tpu.memory_space<semaphore_mem>> -> memref<1x!tpu.dma_semaphore, #tpu.memory_space<semaphore_mem>>
    %7 = tpu.memref_squeeze %6 : memref<1x!tpu.dma_semaphore, #tpu.memory_space<semaphore_mem>> -> memref<!tpu.dma_semaphore, #tpu.memory_space<semaphore_mem>>
    tpu.enqueue_dma source(%4 : memref<1x32xf32, #tpu.memory_space<any>>) target(%5 : memref<1x32xf32, #tpu.memory_space<any>>) target_semaphore(%7 : memref<!tpu.dma_semaphore, #tpu.memory_space<semaphore_mem>>)
    %c0_i32_8 = arith.constant 0 : i32
    %c0_i32_9 = arith.constant 0 : i32
    %c0_i32_10 = arith.constant 0 : i32
    %8 = tpu.memref_slice %arg0[%c0_i32_9, %c0_i32_10] : memref<2x32xf32, #tpu.memory_space<any>> -> memref<1x32xf32, #tpu.memory_space<any>>
    %c0_i32_11 = arith.constant 0 : i32
    %c0_i32_12 = arith.constant 0 : i32
    %9 = tpu.memref_slice %arg1[%c0_i32_11, %c0_i32_12] : memref<2x32xf32, #tpu.memory_space<any>> -> memref<1x32xf32, #tpu.memory_space<any>>
    %10 = tpu.memref_slice %arg2[%c0_i32_8] : memref<2x!tpu.dma_semaphore, #tpu.memory_space<semaphore_mem>> -> memref<1x!tpu.dma_semaphore, #tpu.memory_space<semaphore_mem>>
    %11 = tpu.memref_squeeze %10 : memref<1x!tpu.dma_semaphore, #tpu.memory_space<semaphore_mem>> -> memref<!tpu.dma_semaphore, #tpu.memory_space<semaphore_mem>>
    tpu.wait_dma2 semaphore(%11 : memref<!tpu.dma_semaphore, #tpu.memory_space<semaphore_mem>>) src(%8 : memref<1x32xf32, #tpu.memory_space<any>>) dst(%9 : memref<1x32xf32, #tpu.memory_space<any>>)
    %c1_i32_13 = arith.constant 1 : i32
    %c1_i32_14 = arith.constant 1 : i32
    %c0_i32_15 = arith.constant 0 : i32
    %12 = tpu.memref_slice %arg0[%c1_i32_14, %c0_i32_15] : memref<2x32xf32, #tpu.memory_space<any>> -> memref<1x32xf32, #tpu.memory_space<any>>
    %c1_i32_16 = arith.constant 1 : i32
    %c0_i32_17 = arith.constant 0 : i32
    %13 = tpu.memref_slice %arg1[%c1_i32_16, %c0_i32_17] : memref<2x32xf32, #tpu.memory_space<any>> -> memref<1x32xf32, #tpu.memory_space<any>>
    %14 = tpu.memref_slice %arg2[%c1_i32_13] : memref<2x!tpu.dma_semaphore, #tpu.memory_space<semaphore_mem>> -> memref<1x!tpu.dma_semaphore, #tpu.memory_space<semaphore_mem>>
    %15 = tpu.memref_squeeze %14 : memref<1x!tpu.dma_semaphore, #tpu.memory_space<semaphore_mem>> -> memref<!tpu.dma_semaphore, #tpu.memory_space<semaphore_mem>>
    tpu.wait_dma2 semaphore(%15 : memref<!tpu.dma_semaphore, #tpu.memory_space<semaphore_mem>>) src(%12 : memref<1x32xf32, #tpu.memory_space<any>>) dst(%13 : memref<1x32xf32, #tpu.memory_space<any>>)
    return
  }
}

</mosaic_0001>

<llo_original>
// kernel: tpu_custom_call.1
$region0: #{tpu_custom_call.1}
  #allocation0 [shape = 'u32[]', space=smem, size = 0x4, offset = 0x4, fixed_abs, tag = 'smem constant byte address 0x4 - core index']
  #allocation1 [shape = 'u32[144,128]{1,0:T(1,128)}', space=vmem, size = 0x12000, scoped, tag = 'internal scratch']
  #allocation2 [shape = 's32[2]{0}', space=sflag, size = 0x8, scoped, tag = 'scratch operand']
  #allocation3 [shape = 's32[]', space=sflag, size = 0x4, offset = 0, fixed_abs, tag = 'sflag constant byte address 0x0 - dummy sync flag']
  #allocation4 [shape = 'u32[0]{0}', space=smem, size = 0, offset = 0, fixed_abs, tag = 'smem constant byte address 0x0 - null']
  #allocation5 [shape = 's32[]', space=sflag, size = 0x4, offset = 0, fixed_abs, tag = 'sflag constant byte address 0x0 - dummy sync flag']
  #allocation6 [shape = 'u32[0]{0}', space=smem, size = 0, offset = 0, fixed_abs, tag = 'smem constant byte address 0x0 - null']
  %s0 = inlined_call_operand.hbm [shape: f32[2,32], index: 0, kind: input, shape index: {}]
  %s1 = inlined_call_operand.hbm [shape: f32[2,32], index: 1, kind: output, shape index: {}]
  %s2 = sld [smem:[#allocation0]]
  $region2: #{tpu_custom_call.1} parent=0
    _
  %s4 = ssub.s32 1, %s2
  %s5 = scalar_select 0, %s4, %s2
  %s7 = sshll.u32 1, 14
  %s8 = sxor.u32 4294967295, %s7
  %s11 = sshll.u32 3, 24
  %s12 = sxor.u32 4294967295, %s11
  %s13 = sand.u32 0, %s12
  %s15 = sor.u32 %s13, 0
  %18 = dma.general %s0, 16, %s1, [#allocation2], [#allocation3], [#allocation4], %s15, 0
  %s19 = scalar_lea.hbm %s0, 16
  %s20 = scalar_lea.hbm %s1, 16
  %s21 = scalar_lea.sflag [#allocation2], 1
  %s23 = sshll.u32 1, 14
  %s24 = sxor.u32 4294967295, %s23
  %s27 = sshll.u32 3, 24
  %s28 = sxor.u32 4294967295, %s27
  %s29 = sand.u32 0, %s28
  %s31 = sor.u32 %s29, 0
  %34 = dma.general %s19, 16, %s20, %s21, [#allocation5], [#allocation6], %s31, 0
  %s35 = smul.u32 1, 1
  %s36 = sshll.u32 %s35, 4
  %37 = dma.done [#allocation2], %s36
  %s38 = sshll.u32 %s35, 4
  %39 = dma.done %s21, %s38
  %40 = vsyncmov [#allocation2]
  %s41 = vpop.sfrf %40
  %p42 = scmp.eq.s32.totalorder %s41, 0
  %p43 = pneg %p42
  %45 = shalt.err (%p43)
  %s46 = scalar_lea.sflag [#allocation2], 1
  %47 = vsyncmov %s46
  %s48 = vpop.sfrf %47
  %p49 = scmp.eq.s32.totalorder %s48, 0
  %p50 = pneg %p49
  %52 = shalt.err (%p50)

</llo_original>
